<compile_context>
chip_gen: v5e
topology: v5e:2x2
jax: 0.10.0
libtpu: 0.0.40
codegen_flags: <defaults>
</compile_context>

<pallas_src>
import jax
import jax.numpy as jnp
from jax.experimental import pallas as pl
from jax.experimental.pallas import tpu as pltpu


# ----------------------------------------------------------------------------
# Kernel
# ----------------------------------------------------------------------------
def adapter_kernel(x_ref, w1t_ref, w2t_ref, o_ref):
    # x_ref:   (tile_n, c_in)
    # w1t_ref: (c_in, c_hp)   = W1.T, hidden padded to a multiple of 128 lanes
    # w2t_ref: (c_hp, c_in)   = W2.T
    # o_ref:   (tile_n, c_in)
    x = x_ref[...]
    h = jnp.dot(x, w1t_ref[...], preferred_element_type=jnp.float32)
    h = jnp.maximum(h, 0.0)                                   # ReLU in f32
    y = jnp.dot(h.astype(w2t_ref.dtype), w2t_ref[...],
                preferred_element_type=jnp.float32)
    y = jnp.maximum(y, 0.0)                                   # ReLU in f32
    o_ref[...] = y.astype(o_ref.dtype)


# ----------------------------------------------------------------------------
# One-time parameter preprocessing (never pay a transpose per forward call).
# ----------------------------------------------------------------------------
def prepare_adapter_params(w1, w2, *, dtype=None, lane=128):
    """w1: (c_hidden, c_in), w2: (c_in, c_hidden) in nn.Linear layout.

    Returns (w1t, w2t) = (c_in, Hp), (Hp, c_in) with Hp = hidden rounded up to 128.
    Recommended production path: dtype=jnp.bfloat16 (halves weight + activation HBM
    traffic; accumulation stays f32 inside the kernel).  On v7x, fp8 (e4m3) weights
    are the further-quantized option — int8 is off the MXU fast path there.
    """
    c_hidden, c_in = w1.shape
    assert w2.shape == (c_in, c_hidden)
    w1t = w1.T  # (c_in, c_hidden)
    w2t = w2.T  # (c_hidden, c_in)
    hp = ((c_hidden + lane - 1) // lane) * lane
    if hp != c_hidden:
        w1t = jnp.pad(w1t, ((0, 0), (0, hp - c_hidden)))
        w2t = jnp.pad(w2t, ((0, hp - c_hidden), (0, 0)))
    if dtype is not None:
        w1t = w1t.astype(dtype)
        w2t = w2t.astype(dtype)
    return w1t, w2t


# ----------------------------------------------------------------------------
# Generation-aware VMEM capacity query.
# ----------------------------------------------------------------------------
def _vmem_capacity_bytes():
    try:
        info = pltpu.get_tpu_info()
        cap = getattr(info, "vmem_capacity_bytes", None)
        if cap:
            return int(cap)
    except Exception:
        pass
    return 64 << 20  # conservative default: v7x (smallest VMEM per TensorCore)


# ----------------------------------------------------------------------------
# Tile selection: accurate VMEM model (weights + f32 intermediates) with a
# minimum grid depth for pipelining / megacore.
# ----------------------------------------------------------------------------
def _choose_tile_n(n_rows, c_in, c_hp, x_itemsize, w_itemsize, vmem_capacity):
    sub = 8 if x_itemsize >= 4 else 16           # sublane granularity (f32 / bf16)
    n_cap = -(-n_rows // sub) * sub              # rows rounded up to sublane

    weight_bytes = 2 * c_in * c_hp * w_itemsize  # W1.T + W2.T, single-buffered
    # Budget ~half of physical VMEM for the streamed tiles; leave the rest for
    # the weights, compiler internal scratch and pipeline metadata.
    budget = max(vmem_capacity // 2 - weight_bytes, 2 << 20)
    per_row = (2 * c_in * x_itemsize             # x tile, double-buffered
               + 2 * c_in * x_itemsize           # out tile, double-buffered
               + c_hp * 4                        # f32 hidden activation
               + c_in * 4)                       # f32 output acc before downcast
    cap = min(budget // max(per_row, 1), 1024)   # 1024: vreg/spill pressure cap

    # Keep >= 8 grid steps when the batch allows it (>= 4 per TensorCore under
    # v7x megacore) so the x/out HBM stream stays hidden behind compute.
    min_steps = 8
    if n_cap >= min_steps * sub:
        cap = min(cap, -(-n_cap // min_steps))

    cap = max(sub, (cap // sub) * sub)
    if n_cap <= cap:
        return n_cap                             # small batch: one (masked) tile

    # Balance tiles so the masked tail block isn't mostly wasted work; prefer
    # 128-row alignment when large (full MXU passes, esp. v5e's 4x128x128 MXUs).
    n_tiles = -(-n_cap // cap)
    tile = -(-(-(-n_cap // n_tiles)) // sub) * sub
    if tile >= 128:
        tile = max(128, (tile // 128) * 128)
    return max(sub, min(tile, cap))


# ----------------------------------------------------------------------------
# Forward wrapper
# ----------------------------------------------------------------------------
def adapter_forward(x, w1t, w2t, *, tile_n=None):
    """x: (..., c_in); w1t: (c_in, Hp); w2t: (Hp, c_in) from prepare_adapter_params."""
    orig_shape = x.shape
    c_in = orig_shape[-1]
    c_hp = w1t.shape[1]
    assert w1t.shape == (c_in, c_hp)
    assert w2t.shape == (c_hp, c_in)

    x2d = x.reshape(-1, c_in)
    N = x2d.shape[0]

    x_itemsize = jnp.dtype(x2d.dtype).itemsize
    w_itemsize = jnp.dtype(w1t.dtype).itemsize
    vmem_cap = _vmem_capacity_bytes()

    sub = 8 if x_itemsize >= 4 else 16
    if tile_n is None:
        tile_n = _choose_tile_n(N, c_in, c_hp, x_itemsize, w_itemsize, vmem_cap)
    tile_n = max(sub, (tile_n // sub) * sub)

    # No host-side padding: Pallas masks the ragged last block.  Safe because the
    # computation is row-independent and partial output-block writes are masked.
    grid = (pl.cdiv(N, tile_n),)

    def build(single_buffer_weights):
        w_bufs = 1 if single_buffer_weights else 2
        weight_bytes = w_bufs * 2 * c_in * c_hp * w_itemsize
        stream_bytes = tile_n * (4 * c_in * x_itemsize + 4 * (c_hp + c_in))
        vmem_limit = weight_bytes + stream_bytes + (16 << 20)   # +headroom
        vmem_limit = int(max(32 << 20, min(vmem_limit, (vmem_cap * 3) // 4)))

        wkw = {"pipeline_mode": pl.Buffered(1)} if single_buffer_weights else {}
        return pl.pallas_call(
            adapter_kernel,
            out_shape=jax.ShapeDtypeStruct((N, c_in), x2d.dtype),
            grid_spec=pltpu.PrefetchScalarGridSpec(
                num_scalar_prefetch=0,
                grid=grid,
                in_specs=[
                    pl.BlockSpec((tile_n, c_in), lambda i: (i, 0)),        # streamed x
                    pl.BlockSpec((c_in, c_hp), lambda i: (0, 0), **wkw),   # W1.T resident
                    pl.BlockSpec((c_hp, c_in), lambda i: (0, 0), **wkw),   # W2.T resident
                ],
                out_specs=pl.BlockSpec((tile_n, c_in), lambda i: (i, 0)),
            ),
            compiler_params=pltpu.CompilerParams(
                dimension_semantics=("parallel",),   # megacore-shard rows (v7x)
                vmem_limit_bytes=vmem_limit,
            ),
        )

    single_buffer = hasattr(pl, "Buffered")
    try:
        out = build(single_buffer)(x2d, w1t, w2t)
    except Exception:
        if not single_buffer:
            raise
        # Fallback: default (double-buffered) weight pipelining.
        out = build(False)(x2d, w1t, w2t)

    return out.reshape(orig_shape)


def adapter_reference(x, w1, w2):
    """Pure-JAX reference matching torch semantics (f32)."""
    h = jnp.maximum(x @ w1.T, 0.0)
    y = jnp.maximum(h @ w2.T, 0.0)
    return y


if __name__ == "__main__":
    key = jax.random.PRNGKey(0)
    k_x, k_w1, k_w2, k_x2 = jax.random.split(key, 4)

    # ---- Test 1: tiny shapes straight from the module (c_in=32, reduction=4). ----
    N, c_in, reduction = 8, 32, 4
    c_hidden = c_in // reduction
    x = jax.random.normal(k_x, (N, c_in), dtype=jnp.float32)
    w1 = jax.random.normal(k_w1, (c_hidden, c_in), dtype=jnp.float32) * 0.1
    w2 = jax.random.normal(k_w2, (c_in, c_hidden), dtype=jnp.float32) * 0.1

    w1t, w2t = prepare_adapter_params(w1, w2)        # one-time transpose + pad
    out = jax.block_until_ready(adapter_forward(x, w1t, w2t))
    ref = adapter_reference(x, w1, w2)
    assert out.shape == (N, c_in)
    assert jnp.allclose(out, ref, atol=1e-5, rtol=1e-5), "f32 mismatch vs reference"

    # ---- Test 2: non-multiple batch + wider channels (exercises ragged tail). ----
    N2, c_in2 = 50, 256
    c_hidden2 = c_in2 // reduction
    kx2, kw1b, kw2b = jax.random.split(k_x2, 3)
    x2 = jax.random.normal(kx2, (N2, c_in2), dtype=jnp.float32)
    w1b = jax.random.normal(kw1b, (c_hidden2, c_in2), dtype=jnp.float32) * 0.1
    w2b = jax.random.normal(kw2b, (c_in2, c_hidden2), dtype=jnp.float32) * 0.1

    w1bt, w2bt = prepare_adapter_params(w1b, w2b)
    out2 = jax.block_until_ready(adapter_forward(x2, w1bt, w2bt))
    ref2 = adapter_reference(x2, w1b, w2b)
    assert out2.shape == (N2, c_in2)
    assert jnp.allclose(out2, ref2, atol=1e-5, rtol=1e-5), "ragged-tail f32 mismatch"

    # ---- Test 3: bf16 streaming path (recommended: halves HBM traffic). ----
    w1bt16, w2bt16 = prepare_adapter_params(w1b, w2b, dtype=jnp.bfloat16)
    out3 = jax.block_until_ready(
        adapter_forward(x2.astype(jnp.bfloat16), w1bt16, w2bt16))
    assert out3.shape == (N2, c_in2)
    assert jnp.allclose(out3.astype(jnp.float32), ref2, atol=5e-2, rtol=5e-2), \
        "bf16 mismatch vs f32 reference"

    # ---- Test 4: 3-D input (leading dims flattened like nn.Linear). ----
    x4 = x2.reshape(2, 25, c_in2)
    out4 = jax.block_until_ready(adapter_forward(x4, w1bt, w2bt))
    assert out4.shape == (2, 25, c_in2)
    assert jnp.allclose(out4.reshape(N2, c_in2), ref2, atol=1e-5, rtol=1e-5), \
        "3-D reshape mismatch"

    print("KERNEL_OK")
</pallas_src>

<mosaic_0001>
module attributes {stable_mosaic.version = 11 : i64} {
  func.func @adapter_kernel(%arg0: i32, %arg1: memref<8x32xf32, #tpu.memory_space<vmem>>, %arg2: memref<32x128xf32, #tpu.memory_space<vmem>>, %arg3: memref<128x32xf32, #tpu.memory_space<vmem>>, %arg4: memref<8x32xf32, #tpu.memory_space<vmem>>) attributes {dimension_semantics = [#tpu.dimension_semantics<parallel>], iteration_bounds = array<i64: 1>, scalar_prefetch = 0 : i64, scratch_operands = 0 : i64, tpu.core_type = #tpu.core_type<tc>, window_params = [{transform_indices = @transform_0, window_bounds = array<i64: 8, 32>}, {pipeline_mode = #tpu.pipeline_mode<synchronous>, transform_indices = @transform_1, window_bounds = array<i64: 32, 128>}, {pipeline_mode = #tpu.pipeline_mode<synchronous>, transform_indices = @transform_2, window_bounds = array<i64: 128, 32>}, {transform_indices = @transform_3, window_bounds = array<i64: 8, 32>}]} {
    %c0 = arith.constant 0 : index
    %c0_0 = arith.constant 0 : index
    %0 = vector.load %arg1[%c0, %c0_0] : memref<8x32xf32, #tpu.memory_space<vmem>>, vector<8x32xf32>
    %c0_1 = arith.constant 0 : index
    %c0_2 = arith.constant 0 : index
    %1 = vector.load %arg2[%c0_1, %c0_2] : memref<32x128xf32, #tpu.memory_space<vmem>>, vector<32x128xf32>
    %cst = arith.constant dense<0.000000e+00> : vector<8x128xf32>
    %2 = tpu.matmul %0, %1, %cst {dimension_numbers = #tpu.dot_dimension_numbers<[1], [0], [0], [1], [0, 0, 1, 1], [], []>} : vector<8x32xf32>, vector<32x128xf32>, vector<8x128xf32> -> vector<8x128xf32>
    %cst_3 = arith.constant 0.000000e+00 : f32
    %3 = vector.broadcast %cst_3 : f32 to vector<8x128xf32>
    %4 = arith.maximumf %2, %3 : vector<8x128xf32>
    %c0_4 = arith.constant 0 : index
    %c0_5 = arith.constant 0 : index
    %5 = vector.load %arg3[%c0_4, %c0_5] : memref<128x32xf32, #tpu.memory_space<vmem>>, vector<128x32xf32>
    %cst_6 = arith.constant dense<0.000000e+00> : vector<8x32xf32>
    %6 = tpu.matmul %4, %5, %cst_6 {dimension_numbers = #tpu.dot_dimension_numbers<[1], [0], [0], [1], [0, 0, 1, 1], [], []>} : vector<8x128xf32>, vector<128x32xf32>, vector<8x32xf32> -> vector<8x32xf32>
    %cst_7 = arith.constant 0.000000e+00 : f32
    %7 = vector.broadcast %cst_7 : f32 to vector<8x32xf32>
    %8 = arith.maximumf %6, %7 : vector<8x32xf32>
    %c0_8 = arith.constant 0 : index
    %c0_9 = arith.constant 0 : index
    %9 = vector.load %arg4[%c0_8, %c0_9] : memref<8x32xf32, #tpu.memory_space<vmem>>, vector<8x32xf32>
    tpu.vector_store %arg4[%c0_8, %c0_9], %8 {strides = array<i32>} : memref<8x32xf32, #tpu.memory_space<vmem>>, vector<8x32xf32>,
    return
  }
  func.func @transform_0(%arg0: i32) -> (i32, i32) {
    %c0_i32 = arith.constant 0 : i32
    %c0_i32_0 = arith.constant 0 : i32
    return %arg0, %c0_i32 : i32, i32
  }
  func.func @transform_1(%arg0: i32) -> (i32, i32) {
    %c0_i32 = arith.constant 0 : i32
    %c0_i32_0 = arith.constant 0 : i32
    %c0_i32_1 = arith.constant 0 : i32
    return %c0_i32, %c0_i32_0 : i32, i32
  }
  func.func @transform_2(%arg0: i32) -> (i32, i32) {
    %c0_i32 = arith.constant 0 : i32
    %c0_i32_0 = arith.constant 0 : i32
    %c0_i32_1 = arith.constant 0 : i32
    return %c0_i32, %c0_i32_0 : i32, i32
  }
  func.func @transform_3(%arg0: i32) -> (i32, i32) {
    %c0_i32 = arith.constant 0 : i32
    %c0_i32_0 = arith.constant 0 : i32
    return %arg0, %c0_i32 : i32, i32
  }
}

module attributes {stable_mosaic.version = 11 : i64} {
  func.func @adapter_kernel(%arg0: i32, %arg1: memref<8x32xf32, #tpu.memory_space<vmem>>, %arg2: memref<32x128xf32, #tpu.memory_space<vmem>>, %arg3: memref<128x32xf32, #tpu.memory_space<vmem>>, %arg4: memref<8x32xf32, #tpu.memory_space<vmem>>) attributes {dimension_semantics = [#tpu.dimension_semantics<parallel>], iteration_bounds = array<i64: 1>, scalar_prefetch = 0 : i64, scratch_operands = 0 : i64, tpu.core_type = #tpu.core_type<tc>, window_params = [{transform_indices = @transform_0, window_bounds = array<i64: 8, 32>}, {pipeline_mode = #tpu.pipeline_mode<synchronous>, transform_indices = @transform_1, window_bounds = array<i64: 32, 128>}, {pipeline_mode = #tpu.pipeline_mode<synchronous>, transform_indices = @transform_2, window_bounds = array<i64: 128, 32>}, {transform_indices = @transform_3, window_bounds = array<i64: 8, 32>}]} {
    %c0 = arith.constant 0 : index
    %c0_0 = arith.constant 0 : index
    %0 = vector.load %arg1[%c0, %c0_0] : memref<8x32xf32, #tpu.memory_space<vmem>>, vector<8x32xf32>
    %c0_1 = arith.constant 0 : index
    %c0_2 = arith.constant 0 : index
    %1 = vector.load %arg2[%c0_1, %c0_2] : memref<32x128xf32, #tpu.memory_space<vmem>>, vector<32x128xf32>
    %cst = arith.constant dense<0.000000e+00> : vector<8x128xf32>
    %2 = tpu.matmul %0, %1, %cst {dimension_numbers = #tpu.dot_dimension_numbers<[1], [0], [0], [1], [0, 0, 1, 1], [], []>} : vector<8x32xf32>, vector<32x128xf32>, vector<8x128xf32> -> vector<8x128xf32>
    %cst_3 = arith.constant 0.000000e+00 : f32
    %3 = vector.broadcast %cst_3 : f32 to vector<8x128xf32>
    %4 = arith.maximumf %2, %3 : vector<8x128xf32>
    %c0_4 = arith.constant 0 : index
    %c0_5 = arith.constant 0 : index
    %5 = vector.load %arg3[%c0_4, %c0_5] : memref<128x32xf32, #tpu.memory_space<vmem>>, vector<128x32xf32>
    %cst_6 = arith.constant dense<0.000000e+00> : vector<8x32xf32>
    %6 = tpu.matmul %4, %5, %cst_6 {dimension_numbers = #tpu.dot_dimension_numbers<[1], [0], [0], [1], [0, 0, 1, 1], [], []>} : vector<8x128xf32>, vector<128x32xf32>, vector<8x32xf32> -> vector<8x32xf32>
    %cst_7 = arith.constant 0.000000e+00 : f32
    %7 = vector.broadcast %cst_7 : f32 to vector<8x32xf32>
    %8 = arith.maximumf %6, %7 : vector<8x32xf32>
    %c0_8 = arith.constant 0 : index
    %c0_9 = arith.constant 0 : index
    %9 = vector.load %arg4[%c0_8, %c0_9] : memref<8x32xf32, #tpu.memory_space<vmem>>, vector<8x32xf32>
    tpu.vector_store %arg4[%c0_8, %c0_9], %8 {strides = array<i32>} : memref<8x32xf32, #tpu.memory_space<vmem>>, vector<8x32xf32>,
    return
  }
  func.func @transform_0(%arg0: i32) -> (i32, i32) {
    %c0_i32 = arith.constant 0 : i32
    %c0_i32_0 = arith.constant 0 : i32
    return %arg0, %c0_i32 : i32, i32
  }
  func.func @transform_1(%arg0: i32) -> (i32, i32) {
    %c0_i32 = arith.constant 0 : i32
    %c0_i32_0 = arith.constant 0 : i32
    %c0_i32_1 = arith.constant 0 : i32
    return %c0_i32, %c0_i32_0 : i32, i32
  }
  func.func @transform_2(%arg0: i32) -> (i32, i32) {
    %c0_i32 = arith.constant 0 : i32
    %c0_i32_0 = arith.constant 0 : i32
    %c0_i32_1 = arith.constant 0 : i32
    return %c0_i32, %c0_i32_0 : i32, i32
  }
  func.func @transform_3(%arg0: i32) -> (i32, i32) {
    %c0_i32 = arith.constant 0 : i32
    %c0_i32_0 = arith.constant 0 : i32
    return %arg0, %c0_i32 : i32, i32
  }
}

</mosaic_0001>

<llo_original>
// kernel: tpu_custom_call.1
$region0: #{tpu_custom_call.1}
  #allocation0 [shape = 'u32[]', space=smem, size = 0x4, offset = 0x4, fixed_abs, tag = 'smem constant byte address 0x4 - core index']
  #allocation1 [shape = 'u32[72,128]{1,0:T(1,128)}', space=vmem, size = 0x9000, scoped, tag = 'internal scratch']
  %s0 = inlined_call_operand.vmem [shape: f32[8,32], index: 0, kind: input, shape index: {}]
  %s1 = inlined_call_operand.vmem [shape: f32[32,128], index: 1, kind: input, shape index: {}]
  %s2 = inlined_call_operand.vmem [shape: f32[128,32], index: 2, kind: input, shape index: {}]
  %s3 = inlined_call_operand.hbm [shape: f32[8,32], index: 3, kind: output, shape index: {}]
  %s4 = sld [smem:[#allocation0]]
  $region22: #{tpu_custom_call.1} parent=0
    _
  %s6 = ssub.s32 1, %s4
  %s7 = scalar_select 0, %s6, %s4
  $region1: #{tpu_custom_call.1} parent=0
    #allocation2 [shape = 'u8[4096]{0}', space=vmem, size = 0x1000, scoped, tag = 'output window, operand 0, single buffered']
    #allocation3 [shape = 's32[1]{0}', space=sflag, size = 0x4, scoped, tag = 'scoped memory for tpu_custom_call.1']
    %8 = vsyncpa [#allocation3], 0
    // Predicated region
    $region2: #{tpu_custom_call.1} parent=1 // pred_check
      _
    $region3: #{tpu_custom_call.1} parent=1 // pred_check_branch
      %10 = sbr.rel (0) target = $region5
    $region4: #{tpu_custom_call.1} parent=1 // pred_region
      _
    $region5: #{tpu_custom_call.1} parent=1 // pred_fallthru
      _
    // Predicated region
    $region6: #{tpu_custom_call.1} parent=1 // pred_check
      _
    $region7: #{tpu_custom_call.1} parent=1 // pred_check_branch
      %12 = sbr.rel (0) target = $region9
    $region8: #{tpu_custom_call.1} parent=1 // pred_region
      _
    $region9: #{tpu_custom_call.1} parent=1 // pred_fallthru
      _
    // Predicated region
    $region10: #{tpu_custom_call.1} parent=1 // pred_check
      _
    $region11: #{tpu_custom_call.1} parent=1 // pred_check_branch
      %14 = sbr.rel (0) target = $region13
    $region12: #{tpu_custom_call.1} parent=1 // pred_region
      _
    $region13: #{tpu_custom_call.1} parent=1 // pred_fallthru
      _
    %v15 = vld [vmem:[%s0] sm:$0xff]
    %v16 = vld [vmem:[%s1] sm:$0xff]
    %v17 = vld [vmem:[%s1 + $0x8] sm:$0xff]
    %v18 = vld [vmem:[%s1 + $0x10] sm:$0xff]
    %v19 = vld [vmem:[%s1 + $0x18] sm:$0xff]
    %vm20 = vcmask 261120
    %v22 = vsel %vm20, %v15, 0
    %24 = vmatpush.msra.mxu0 0.0
    %25 = vmatpush.msra.mxu0 0.0
    %26 = vmatpush.msra.mxu0 0.0
    %27 = vmatpush.msra.mxu0 0.0
    %28 = vmatpush.msra.mxu0 0.0
    %29 = vmatpush.msra.mxu0 0.0
    %30 = vmatpush.msra.mxu0 0.0
    %31 = vmatpush.msra.mxu0 0.0
    %32 = vmatpush.msra.mxu0 0.0
    %33 = vmatpush.msra.mxu0 0.0
    %34 = vmatpush.msra.mxu0 0.0
    %35 = vmatpush.msra.mxu0 0.0
    %36 = vmatpush.msra.mxu0 %v19
    %37 = vmatpush.msra.mxu0 %v18
    %38 = vmatpush.msra.mxu0 %v17
    %39 = vmatpush.msra.mxu0 %v16
    %40 = vmatmul.f32.gmra.mxu0 %v22
    %v41 = vpop.f32.mrf.mxu0
    %v42 = vadd.f32 0.0, %v41
    %43 = vdwg.mxu0
    %v44 = vmax.f32 %v42, 0.0
    %v45 = vld [vmem:[%s2] sm:$0xff]
    %v46 = vld [vmem:[%s2 + $0x8] sm:$0xff]
    %v47 = vld [vmem:[%s2 + $0x10] sm:$0xff]
    %v48 = vld [vmem:[%s2 + $0x18] sm:$0xff]
    %v49 = vld [vmem:[%s2 + $0x20] sm:$0xff]
    %v50 = vld [vmem:[%s2 + $0x28] sm:$0xff]
    %v51 = vld [vmem:[%s2 + $0x30] sm:$0xff]
    %v52 = vld [vmem:[%s2 + $0x38] sm:$0xff]
    %v53 = vld [vmem:[%s2 + $0x40] sm:$0xff]
    %v54 = vld [vmem:[%s2 + $0x48] sm:$0xff]
    %v55 = vld [vmem:[%s2 + $0x50] sm:$0xff]
    %v56 = vld [vmem:[%s2 + $0x58] sm:$0xff]
    %v57 = vld [vmem:[%s2 + $0x60] sm:$0xff]
    %v58 = vld [vmem:[%s2 + $0x68] sm:$0xff]
    %v59 = vld [vmem:[%s2 + $0x70] sm:$0xff]
    %v60 = vld [vmem:[%s2 + $0x78] sm:$0xff]
    %61 = vmatpush.msra.mxu0 %v60
    %62 = vmatpush.msra.mxu0 %v59
    %63 = vmatpush.msra.mxu0 %v58
    %64 = vmatpush.msra.mxu0 %v57
    %65 = vmatpush.msra.mxu0 %v56
    %66 = vmatpush.msra.mxu0 %v55
    %67 = vmatpush.msra.mxu0 %v54
    %68 = vmatpush.msra.mxu0 %v53
    %69 = vmatpush.msra.mxu0 %v52
    %70 = vmatpush.msra.mxu0 %v51
    %71 = vmatpush.msra.mxu0 %v50
    %72 = vmatpush.msra.mxu0 %v49
    %73 = vmatpush.msra.mxu0 %v48
    %74 = vmatpush.msra.mxu0 %v47
    %75 = vmatpush.msra.mxu0 %v46
    %76 = vmatpush.msra.mxu0 %v45
    %77 = vmatmul.f32.gmra.mxu0 %v44
    %v78 = vpop.f32.mrf.mxu0
    %v79 = vadd.f32 0.0, %v78
    %80 = vdwg.mxu0
    %v81 = vmax.f32 %v79, 0.0
    %82 = vst.msk [vmem:[#allocation2] sm:$0xff] %vm20, %v81
    // Predicated region
    $region14: #{tpu_custom_call.1} parent=1 // pred_check
      _
    $region15: #{tpu_custom_call.1} parent=1 // pred_check_branch
      %84 = sbr.rel (0) target = $region17
    $region16: #{tpu_custom_call.1} parent=1 // pred_region
      %86 = vsyncadd [#allocation3], 0
      %s88 = sshll.u32 [#allocation2], 4
      %s89 = int_to_ptr.vmem [resolvable:$true] %s88
      %s90 = sshll.u32 %s3, 4
      %s91 = int_to_ptr.hbm [resolvable:$true] %s90
      %93 = dma.vmem_to_hbm [thread:$0]  %s89, 128, %s91, [#allocation3]
    $region17: #{tpu_custom_call.1} parent=1 // pred_fallthru
      _
    // Predicated region
    $region18: #{tpu_custom_call.1} parent=1 // pred_check
      _
    $region19: #{tpu_custom_call.1} parent=1 // pred_check_branch
      %95 = sbr.rel (0) target = $region21
    $region20: #{tpu_custom_call.1} parent=1 // pred_region
      %97 = dma.done [#allocation3], 128
    $region21: #{tpu_custom_call.1} parent=1 // pred_fallthru
      _
    %98 = vsyncpa [#allocation3], 1

// kernel: tpu_custom_call.1
$region0: #{tpu_custom_call.1}
  #allocation0 [shape = 'u32[]', space=smem, size = 0x4, offset = 0x4, fixed_abs, tag = 'smem constant byte address 0x4 - core index']
  #allocation1 [shape = 'u32[72,128]{1,0:T(1,128)}', space=vmem, size = 0x9000, scoped, tag = 'internal scratch']
  %s0 = inlined_call_operand.vmem [shape: f32[8,32], index: 0, kind: input, shape index: {}]
  %s1 = inlined_call_operand.vmem [shape: f32[32,128], index: 1, kind: input, shape index: {}]
  %s2 = inlined_call_operand.vmem [shape: f32[128,32], index: 2, kind: input, shape index: {}]
  %s3 = inlined_call_operand.hbm [shape: f32[8,32], index: 3, kind: output, shape index: {}]
  %s4 = sld [smem:[#allocation0]]
  $region22: #{tpu_custom_call.1} parent=0
    _
  %s6 = ssub.s32 1, %s4
  %s7 = scalar_select 0, %s6, %s4
  $region1: #{tpu_custom_call.1} parent=0
    #allocation2 [shape = 'u8[4096]{0}', space=vmem, size = 0x1000, scoped, tag = 'output window, operand 0, single buffered']
    #allocation3 [shape = 's32[1]{0}', space=sflag, size = 0x4, scoped, tag = 'scoped memory for tpu_custom_call.1']
    %8 = vsyncpa [#allocation3], 0
    // Predicated region
    $region2: #{tpu_custom_call.1} parent=1 // pred_check
      _
    $region3: #{tpu_custom_call.1} parent=1 // pred_check_branch
      %10 = sbr.rel (0) target = $region5
    $region4: #{tpu_custom_call.1} parent=1 // pred_region
      _
    $region5: #{tpu_custom_call.1} parent=1 // pred_fallthru
      _
    // Predicated region
    $region6: #{tpu_custom_call.1} parent=1 // pred_check
      _
    $region7: #{tpu_custom_call.1} parent=1 // pred_check_branch
      %12 = sbr.rel (0) target = $region9
    $region8: #{tpu_custom_call.1} parent=1 // pred_region
      _
    $region9: #{tpu_custom_call.1} parent=1 // pred_fallthru
      _
    // Predicated region
    $region10: #{tpu_custom_call.1} parent=1 // pred_check
      _
    $region11: #{tpu_custom_call.1} parent=1 // pred_check_branch
      %14 = sbr.rel (0) target = $region13
    $region12: #{tpu_custom_call.1} parent=1 // pred_region
      _
    $region13: #{tpu_custom_call.1} parent=1 // pred_fallthru
      _
    %v15 = vld [vmem:[%s0] sm:$0xff]
    %v16 = vld [vmem:[%s1] sm:$0xff]
    %v17 = vld [vmem:[%s1 + $0x8] sm:$0xff]
    %v18 = vld [vmem:[%s1 + $0x10] sm:$0xff]
    %v19 = vld [vmem:[%s1 + $0x18] sm:$0xff]
    %vm20 = vcmask 261120
    %v22 = vsel %vm20, %v15, 0
    %24 = vmatpush.msra.mxu0 0.0
    %25 = vmatpush.msra.mxu0 0.0
    %26 = vmatpush.msra.mxu0 0.0
    %27 = vmatpush.msra.mxu0 0.0
    %28 = vmatpush.msra.mxu0 0.0
    %29 = vmatpush.msra.mxu0 0.0
    %30 = vmatpush.msra.mxu0 0.0
    %31 = vmatpush.msra.mxu0 0.0
    %32 = vmatpush.msra.mxu0 0.0
    %33 = vmatpush.msra.mxu0 0.0
    %34 = vmatpush.msra.mxu0 0.0
    %35 = vmatpush.msra.mxu0 0.0
    %36 = vmatpush.msra.mxu0 %v19
    %37 = vmatpush.msra.mxu0 %v18
    %38 = vmatpush.msra.mxu0 %v17
    %39 = vmatpush.msra.mxu0 %v16
    %40 = vmatmul.f32.gmra.mxu0 %v22
    %v41 = vpop.f32.mrf.mxu0
    %v42 = vadd.f32 0.0, %v41
    %43 = vdwg.mxu0
    %v44 = vmax.f32 %v42, 0.0
    %v45 = vld [vmem:[%s2] sm:$0xff]
    %v46 = vld [vmem:[%s2 + $0x8] sm:$0xff]
    %v47 = vld [vmem:[%s2 + $0x10] sm:$0xff]
    %v48 = vld [vmem:[%s2 + $0x18] sm:$0xff]
    %v49 = vld [vmem:[%s2 + $0x20] sm:$0xff]
    %v50 = vld [vmem:[%s2 + $0x28] sm:$0xff]
    %v51 = vld [vmem:[%s2 + $0x30] sm:$0xff]
    %v52 = vld [vmem:[%s2 + $0x38] sm:$0xff]
    %v53 = vld [vmem:[%s2 + $0x40] sm:$0xff]
    %v54 = vld [vmem:[%s2 + $0x48] sm:$0xff]
    %v55 = vld [vmem:[%s2 + $0x50] sm:$0xff]
    %v56 = vld [vmem:[%s2 + $0x58] sm:$0xff]
    %v57 = vld [vmem:[%s2 + $0x60] sm:$0xff]
    %v58 = vld [vmem:[%s2 + $0x68] sm:$0xff]
    %v59 = vld [vmem:[%s2 + $0x70] sm:$0xff]
    %v60 = vld [vmem:[%s2 + $0x78] sm:$0xff]
    %61 = vmatpush.msra.mxu0 %v60
    %62 = vmatpush.msra.mxu0 %v59
    %63 = vmatpush.msra.mxu0 %v58
    %64 = vmatpush.msra.mxu0 %v57
    %65 = vmatpush.msra.mxu0 %v56
    %66 = vmatpush.msra.mxu0 %v55
    %67 = vmatpush.msra.mxu0 %v54
    %68 = vmatpush.msra.mxu0 %v53
    %69 = vmatpush.msra.mxu0 %v52
    %70 = vmatpush.msra.mxu0 %v51
    %71 = vmatpush.msra.mxu0 %v50
    %72 = vmatpush.msra.mxu0 %v49
    %73 = vmatpush.msra.mxu0 %v48
    %74 = vmatpush.msra.mxu0 %v47
    %75 = vmatpush.msra.mxu0 %v46
    %76 = vmatpush.msra.mxu0 %v45
    %77 = vmatmul.f32.gmra.mxu0 %v44
    %v78 = vpop.f32.mrf.mxu0
    %v79 = vadd.f32 0.0, %v78
    %80 = vdwg.mxu0
    %v81 = vmax.f32 %v79, 0.0
    %82 = vst.msk [vmem:[#allocation2] sm:$0xff] %vm20, %v81
    // Predicated region
    $region14: #{tpu_custom_call.1} parent=1 // pred_check
      _
    $region15: #{tpu_custom_call.1} parent=1 // pred_check_branch
      %84 = sbr.rel (0) target = $region17
    $region16: #{tpu_custom_call.1} parent=1 // pred_region
      %86 = vsyncadd [#allocation3], 0
      %s88 = sshll.u32 [#allocation2], 4
      %s89 = int_to_ptr.vmem [resolvable:$true] %s88
      %s90 = sshll.u32 %s3, 4
      %s91 = int_to_ptr.hbm [resolvable:$true] %s90
      %93 = dma.vmem_to_hbm [thread:$0]  %s89, 128, %s91, [#allocation3]
    $region17: #{tpu_custom_call.1} parent=1 // pred_fallthru
      _
    // Predicated region
    $region18: #{tpu_custom_call.1} parent=1 // pred_check
      _
    $region19: #{tpu_custom_call.1} parent=1 // pred_check_branch
      %95 = sbr.rel (0) target = $region21
    $region20: #{tpu_custom_call.1} parent=1 // pred_region
      %97 = dma.done [#allocation3], 128
    $region21: #{tpu_custom_call.1} parent=1 // pred_fallthru
      _
    %98 = vsyncpa [#allocation3], 1

</llo_original>
